<compile_context>
chip_gen: v7x
topology: tpu7x:2x2x1
jax: 0.10.0
libtpu: 0.0.40
codegen_flags: <defaults>
</compile_context>

<pallas_src>
import jax
import jax.numpy as jnp
from jax.experimental import pallas as pl
from jax.experimental.pallas import tpu as pltpu

_LANES = 512          # lane width of the flattened layout (multiple of 128)
_TILE_ROWS = 512      # max sublane rows per grid step (1 MiB f32 input tile)
_SPLIT_MIN_ROWS = 64  # below this, a single tile / single grid part is used


def _round_up(x, m):
    return ((x + m - 1) // m) * m


def focal_combo_loss(outputs, targets, *, alpha=0.25, beta=2, gamma=1,
                     reduction="mean", weights=None, eps=1e-6):
    """Pallas-TPU forward pass of FocalComboLoss_P."""
    del beta  # present in the module but unused by its forward()
    if weights is None:
        weights = [1.0, 1.0]
    w0, w1 = float(weights[0]), float(weights[1])
    alpha = float(alpha)
    gamma = float(gamma)
    eps = float(eps)

    x = jnp.asarray(outputs)
    if x.dtype != jnp.bfloat16:          # keep bf16 as-is (halves HBM traffic)
        x = x.astype(jnp.float32)
    # targets.view_as(outputs).float(): keep targets in their narrowest native
    # dtype and cast to f32 inside the kernel (no wrapper cast pass over HBM).
    t = jnp.asarray(targets)
    if t.dtype == jnp.bool_:
        t = t.astype(jnp.int8)
    elif t.dtype == jnp.float64:
        t = t.astype(jnp.float32)
    elif t.dtype == jnp.int64:
        t = t.astype(jnp.int32)
    assert t.size == x.size, "targets must be view-able as outputs"

    n_valid = x.size
    rows = pl.cdiv(n_valid, _LANES)
    rows8 = _round_up(max(rows, 1), 8)

    # --- tile / grid selection -------------------------------------------------
    if rows8 < _SPLIT_MIN_ROWS:
        tile_rows = rows8                                   # tiny: one tile
    else:
        # Aim for an even number of <=512-row tiles sized to the input so both
        # v7x TensorCores get balanced work and padding waste stays tiny.
        n_target = max(2, 2 * pl.cdiv(rows8, 2 * _TILE_ROWS))
        tile_rows = _round_up(pl.cdiv(rows8, n_target), 8)
    num_tiles = pl.cdiv(rows8, tile_rows)
    num_parts = min(2, num_tiles)
    tiles_per_part = pl.cdiv(num_tiles, num_parts)
    needs_skip = (num_tiles % num_parts) != 0   # last step of part 1 is a no-op

    rows_padded = num_tiles * tile_rows
    padded_total = rows_padded * _LANES
    pad_elems = padded_total - n_valid

    xf = x.reshape(-1)
    tf = t.reshape(-1)
    if pad_elems:
        # Zero-pad only up to the tile boundary (usually a few rows).  The bias
        # this adds to the running sums is a closed-form constant removed in the
        # scalar epilogue, so the kernel needs no per-element masking.
        xf = jnp.pad(xf, (0, pad_elems))
        tf = jnp.pad(tf, (0, pad_elems))
    x2 = xf.reshape(rows_padded, _LANES)
    t2 = tf.reshape(rows_padded, _LANES)

    # --- kernel ------------------------------------------------------------------
    def kernel(x_ref, t_ref, f_acc, s_acc, xt_acc):
        i = pl.program_id(1)

        @pl.when(i == 0)
        def _():
            f_acc[...] = jnp.zeros_like(f_acc)
            s_acc[...] = jnp.zeros_like(s_acc)
            xt_acc[...] = jnp.zeros_like(xt_acc)

        def compute():
            xv = x_ref[...].astype(jnp.float32)
            tv = t_ref[...].astype(jnp.float32)

            xc = jnp.clip(xv, eps, 1.0 - eps)
            xct = xc * tv                       # reused: bce term + dice intersection
            # xc > 0 after the clamp, so BCE-with-logits needs no max()/abs():
            bce = xc - xct + jnp.log1p(jnp.exp(-xc))
            pt = jnp.exp(-bce)
            one_m_pt = 1.0 - pt
            if gamma == 1.0:
                mod = one_m_pt
            elif gamma == 2.0:
                mod = one_m_pt * one_m_pt
            else:
                mod = jnp.power(one_m_pt, gamma)
            focal = alpha * (mod * bce)

            def fold(v):
                # (tile_rows, LANES) -> (8, LANES): pure element-wise vreg adds
                # (VALU); the single cross-lane reduce happens once, outside the
                # kernel.
                return v.reshape(tile_rows // 8, 8, _LANES).sum(axis=0)

            f_acc[0] += fold(focal)
            s_acc[0] += fold(xc + tv)   # dice denominator only needs sum(xc)+sum(t)
            xt_acc[0] += fold(xct)

        if needs_skip:
            p = pl.program_id(0)

            @pl.when(p * tiles_per_part + i < num_tiles)
            def _():
                compute()
        else:
            compute()

    if needs_skip:
        def in_map(p, i):
            g = p * tiles_per_part + i
            return (jnp.minimum(g, num_tiles - 1), 0)   # clamp the skipped step
    else:
        def in_map(p, i):
            return (p * tiles_per_part + i, 0)

    def out_map(p, i):
        return (p, 0, 0)

    acc_shape = jax.ShapeDtypeStruct((num_parts, 8, _LANES), jnp.float32)
    cost = pl.CostEstimate(
        flops=16 * padded_total,
        transcendentals=3 * padded_total,
        bytes_accessed=padded_total * (x2.dtype.itemsize + t2.dtype.itemsize)
        + 3 * num_parts * 8 * _LANES * 4,
    )

    f_acc, s_acc, xt_acc = pl.pallas_call(
        kernel,
        grid=(num_parts, tiles_per_part),
        in_specs=[
            pl.BlockSpec((tile_rows, _LANES), in_map),
            pl.BlockSpec((tile_rows, _LANES), in_map),
        ],
        out_specs=(
            pl.BlockSpec((1, 8, _LANES), out_map),
            pl.BlockSpec((1, 8, _LANES), out_map),
            pl.BlockSpec((1, 8, _LANES), out_map),
        ),
        out_shape=(acc_shape, acc_shape, acc_shape),
        compiler_params=pltpu.CompilerParams(
            dimension_semantics=("parallel", "arbitrary"),
            vmem_limit_bytes=32 * 1024 * 1024,
        ),
        cost_estimate=cost,
    )(x2, t2)

    # --- tiny scalar epilogue -----------------------------------------------------
    sum_focal = jnp.sum(f_acc)
    sum_s = jnp.sum(s_acc)          # = sum(xc) + sum(t) over the padded buffer
    sum_xt = jnp.sum(xt_acc)

    if pad_elems:
        # Padded elements are exact zeros: x=0 -> xc=eps, t=0.  Each contributes
        # eps to sum_s, focal(0,0) to sum_focal and nothing to sum_xt.  Remove
        # that bias here (same formula as the kernel, f32).
        xc0 = jnp.float32(eps)
        bce0 = xc0 + jnp.log1p(jnp.exp(-xc0))
        pt0 = jnp.exp(-bce0)
        ompt0 = 1.0 - pt0
        if gamma == 1.0:
            mod0 = ompt0
        elif gamma == 2.0:
            mod0 = ompt0 * ompt0
        else:
            mod0 = jnp.power(ompt0, gamma)
        focal0 = jnp.float32(alpha) * (mod0 * bce0)
        sum_focal = sum_focal - pad_elems * focal0
        sum_s = sum_s - pad_elems * xc0

    smooth = 1.0
    dice = 1.0 - (2.0 * sum_xt + smooth) / (sum_s + smooth)

    if reduction == "mean":
        return w0 * sum_focal / n_valid + w1 * dice
    elif reduction == "sum":
        return w0 * sum_focal + w1 * dice * n_valid
    else:
        # TODO(synk): reduction='none' (per-element combined-loss tensor) needs a
        # second element-wise pass once dice is known; not fused here.
        raise NotImplementedError("only 'mean' and 'sum' reductions are implemented")


def _reference(outputs, targets, *, alpha=0.25, gamma=1.0, weights=(1.0, 1.0),
               eps=1e-6, reduction="mean"):
    """Pure-JAX replica of FocalComboLoss_P.forward (for verification)."""
    x = jnp.asarray(outputs, jnp.float32)
    t = jnp.asarray(targets, jnp.float32).reshape(x.shape)
    xc = jnp.clip(x, eps, 1.0 - eps)
    bce = jnp.maximum(xc, 0.0) - xc * t + jnp.log1p(jnp.exp(-jnp.abs(xc)))
    pt = jnp.exp(-bce)
    focal = alpha * (1.0 - pt) ** gamma * bce
    smooth = 1.0
    inter = jnp.sum(xc * t)
    dice = 1.0 - (2.0 * inter + smooth) / (jnp.sum(xc) + jnp.sum(t) + smooth)
    combined = weights[0] * focal + weights[1] * dice
    return jnp.mean(combined) if reduction == "mean" else jnp.sum(combined)


if __name__ == "__main__":
    key = jax.random.PRNGKey(0)

    # (shape, outputs dtype)
    cases = [
        ((2, 4, 16, 16), jnp.float32),    # nominal small shape: single tile, padded tail
        ((2, 3, 33, 37), jnp.float32),    # tiny ragged shape
        ((2, 4, 128, 128), jnp.float32),  # two balanced tiles, 2-way parallel axis, no pad
        ((2, 4, 64, 64), jnp.bfloat16),   # bf16 model outputs pass-through
        ((1, 3, 640, 360), jnp.float32),  # multi-tile ragged: uneven split + skipped step
    ]
    for idx, (shape, dt) in enumerate(cases):
        k1, k2 = jax.random.split(jax.random.fold_in(key, idx))
        outputs = jax.random.uniform(k1, shape, dtype=jnp.float32).astype(dt)
        targets = (jax.random.uniform(k2, shape) > 0.5).astype(jnp.float32)

        loss = focal_combo_loss(outputs, targets)
        jax.block_until_ready(loss)

        ref = _reference(outputs, targets)   # reference sees the same (possibly bf16) values
        assert jnp.allclose(loss, ref, rtol=2e-4, atol=1e-6), (shape, float(loss), float(ref))

    print("KERNEL_OK")
</pallas_src>

<mosaic_0001>
module attributes {stable_mosaic.version = 11 : i64} {
  func.func @kernel(%arg0: i32, %arg1: i32, %arg2: memref<8x512xf32, #tpu.memory_space<vmem>>, %arg3: memref<8x512xf32, #tpu.memory_space<vmem>>, %arg4: memref<1x8x512xf32, #tpu.memory_space<vmem>>, %arg5: memref<1x8x512xf32, #tpu.memory_space<vmem>>, %arg6: memref<1x8x512xf32, #tpu.memory_space<vmem>>) attributes {dimension_semantics = [#tpu.dimension_semantics<parallel>, #tpu.dimension_semantics<arbitrary>], iteration_bounds = array<i64: 1, 1>, scalar_prefetch = 0 : i64, scratch_operands = 0 : i64, tpu.core_type = #tpu.core_type<tc>, window_params = [{transform_indices = @transform_0, window_bounds = array<i64: 8, 512>}, {transform_indices = @transform_1, window_bounds = array<i64: 8, 512>}, {transform_indices = @transform_2, window_bounds = array<i64: 1, 8, 512>}, {transform_indices = @transform_3, window_bounds = array<i64: 1, 8, 512>}, {transform_indices = @transform_4, window_bounds = array<i64: 1, 8, 512>}]} {
    %c0_i32 = arith.constant 0 : i32
    %0 = arith.cmpi eq, %arg1, %c0_i32 : i32
    %1 = arith.extui %0 : i1 to i32
    %c0_i32_0 = arith.constant 0 : i32
    %2 = arith.cmpi ne, %1, %c0_i32_0 : i32
    scf.if %2 {
      %cst_30 = arith.constant 0.000000e+00 : f32
      %49 = vector.broadcast %cst_30 : f32 to vector<1x8x512xf32>
      %c0_31 = arith.constant 0 : index
      %c0_32 = arith.constant 0 : index
      %c0_33 = arith.constant 0 : index
      %50 = vector.load %arg4[%c0_31, %c0_32, %c0_33] : memref<1x8x512xf32, #tpu.memory_space<vmem>>, vector<1x8x512xf32>
      tpu.vector_store %arg4[%c0_31, %c0_32, %c0_33], %49 {strides = array<i32>} : memref<1x8x512xf32, #tpu.memory_space<vmem>>, vector<1x8x512xf32>,
      %cst_34 = arith.constant 0.000000e+00 : f32
      %51 = vector.broadcast %cst_34 : f32 to vector<1x8x512xf32>
      %c0_35 = arith.constant 0 : index
      %c0_36 = arith.constant 0 : index
      %c0_37 = arith.constant 0 : index
      %52 = vector.load %arg5[%c0_35, %c0_36, %c0_37] : memref<1x8x512xf32, #tpu.memory_space<vmem>>, vector<1x8x512xf32>
      tpu.vector_store %arg5[%c0_35, %c0_36, %c0_37], %51 {strides = array<i32>} : memref<1x8x512xf32, #tpu.memory_space<vmem>>, vector<1x8x512xf32>,
      %cst_38 = arith.constant 0.000000e+00 : f32
      %53 = vector.broadcast %cst_38 : f32 to vector<1x8x512xf32>
      %c0_39 = arith.constant 0 : index
      %c0_40 = arith.constant 0 : index
      %c0_41 = arith.constant 0 : index
      %54 = vector.load %arg6[%c0_39, %c0_40, %c0_41] : memref<1x8x512xf32, #tpu.memory_space<vmem>>, vector<1x8x512xf32>
      tpu.vector_store %arg6[%c0_39, %c0_40, %c0_41], %53 {strides = array<i32>} : memref<1x8x512xf32, #tpu.memory_space<vmem>>, vector<1x8x512xf32>,
    } else {
    }
    %c0 = arith.constant 0 : index
    %c0_1 = arith.constant 0 : index
    %3 = vector.load %arg2[%c0, %c0_1] : memref<8x512xf32, #tpu.memory_space<vmem>>, vector<8x512xf32>
    %c0_2 = arith.constant 0 : index
    %c0_3 = arith.constant 0 : index
    %4 = vector.load %arg3[%c0_2, %c0_3] : memref<8x512xf32, #tpu.memory_space<vmem>>, vector<8x512xf32>
    %cst = arith.constant 9.99999997E-7 : f32
    %cst_4 = arith.constant 0.999998986 : f32
    %5 = vector.broadcast %cst : f32 to vector<8x512xf32>
    %6 = arith.maximumf %5, %3 : vector<8x512xf32>
    %7 = vector.broadcast %cst_4 : f32 to vector<8x512xf32>
    %8 = arith.minimumf %7, %6 : vector<8x512xf32>
    %9 = arith.mulf %8, %4 : vector<8x512xf32>
    %10 = arith.subf %8, %9 : vector<8x512xf32>
    %cst_5 = arith.constant 0.000000e+00 : f32
    %11 = vector.broadcast %cst_5 : f32 to vector<8x512xf32>
    %12 = arith.subf %11, %8 : vector<8x512xf32>
    %13 = math.exp %12 : vector<8x512xf32>
    %14 = math.log1p %13 : vector<8x512xf32>
    %15 = arith.addf %10, %14 : vector<8x512xf32>
    %cst_6 = arith.constant 0.000000e+00 : f32
    %16 = vector.broadcast %cst_6 : f32 to vector<8x512xf32>
    %17 = arith.subf %16, %15 : vector<8x512xf32>
    %18 = math.exp %17 : vector<8x512xf32>
    %cst_7 = arith.constant 1.000000e+00 : f32
    %19 = vector.broadcast %cst_7 : f32 to vector<8x512xf32>
    %20 = arith.subf %19, %18 : vector<8x512xf32>
    %21 = arith.mulf %20, %15 : vector<8x512xf32>
    %cst_8 = arith.constant 2.500000e-01 : f32
    %22 = vector.broadcast %cst_8 : f32 to vector<8x512xf32>
    %23 = arith.mulf %22, %21 : vector<8x512xf32>
    %c0_9 = arith.constant 0 : index
    %c0_10 = arith.constant 0 : index
    %c0_11 = arith.constant 0 : index
    %24 = vector.load %arg4[%c0_9, %c0_10, %c0_11] : memref<1x8x512xf32, #tpu.memory_space<vmem>>, vector<1x8x512xf32>
    %25 = vector.shape_cast %24 : vector<1x8x512xf32> to vector<8x512xf32>
    %26 = vector.shape_cast %23 : vector<8x512xf32> to vector<1x8x512xf32>
    %cst_12 = arith.constant dense<0.000000e+00> : vector<8x512xf32>
    %27 = vector.multi_reduction <add>, %26, %cst_12 [0] : vector<1x8x512xf32> to vector<8x512xf32>
    %28 = arith.addf %25, %27 : vector<8x512xf32>
    %c0_13 = arith.constant 0 : index
    %c0_14 = arith.constant 0 : index
    %c0_15 = arith.constant 0 : index
    %29 = vector.load %arg4[%c0_13, %c0_14, %c0_15] : memref<1x8x512xf32, #tpu.memory_space<vmem>>, vector<1x8x512xf32>
    %30 = vector.shape_cast %29 : vector<1x8x512xf32> to vector<8x512xf32>
    %31 = vector.shape_cast %28 : vector<8x512xf32> to vector<1x8x512xf32>
    tpu.vector_store %arg4[%c0_13, %c0_14, %c0_15], %31 {strides = array<i32>} : memref<1x8x512xf32, #tpu.memory_space<vmem>>, vector<1x8x512xf32>,
    %c0_16 = arith.constant 0 : index
    %c0_17 = arith.constant 0 : index
    %c0_18 = arith.constant 0 : index
    %32 = vector.load %arg5[%c0_16, %c0_17, %c0_18] : memref<1x8x512xf32, #tpu.memory_space<vmem>>, vector<1x8x512xf32>
    %33 = vector.shape_cast %32 : vector<1x8x512xf32> to vector<8x512xf32>
    %34 = arith.addf %8, %4 : vector<8x512xf32>
    %35 = vector.shape_cast %34 : vector<8x512xf32> to vector<1x8x512xf32>
    %cst_19 = arith.constant dense<0.000000e+00> : vector<8x512xf32>
    %36 = vector.multi_reduction <add>, %35, %cst_19 [0] : vector<1x8x512xf32> to vector<8x512xf32>
    %37 = arith.addf %33, %36 : vector<8x512xf32>
    %c0_20 = arith.constant 0 : index
    %c0_21 = arith.constant 0 : index
    %c0_22 = arith.constant 0 : index
    %38 = vector.load %arg5[%c0_20, %c0_21, %c0_22] : memref<1x8x512xf32, #tpu.memory_space<vmem>>, vector<1x8x512xf32>
    %39 = vector.shape_cast %38 : vector<1x8x512xf32> to vector<8x512xf32>
    %40 = vector.shape_cast %37 : vector<8x512xf32> to vector<1x8x512xf32>
    tpu.vector_store %arg5[%c0_20, %c0_21, %c0_22], %40 {strides = array<i32>} : memref<1x8x512xf32, #tpu.memory_space<vmem>>, vector<1x8x512xf32>,
    %c0_23 = arith.constant 0 : index
    %c0_24 = arith.constant 0 : index
    %c0_25 = arith.constant 0 : index
    %41 = vector.load %arg6[%c0_23, %c0_24, %c0_25] : memref<1x8x512xf32, #tpu.memory_space<vmem>>, vector<1x8x512xf32>
    %42 = vector.shape_cast %41 : vector<1x8x512xf32> to vector<8x512xf32>
    %43 = vector.shape_cast %9 : vector<8x512xf32> to vector<1x8x512xf32>
    %cst_26 = arith.constant dense<0.000000e+00> : vector<8x512xf32>
    %44 = vector.multi_reduction <add>, %43, %cst_26 [0] : vector<1x8x512xf32> to vector<8x512xf32>
    %45 = arith.addf %42, %44 : vector<8x512xf32>
    %c0_27 = arith.constant 0 : index
    %c0_28 = arith.constant 0 : index
    %c0_29 = arith.constant 0 : index
    %46 = vector.load %arg6[%c0_27, %c0_28, %c0_29] : memref<1x8x512xf32, #tpu.memory_space<vmem>>, vector<1x8x512xf32>
    %47 = vector.shape_cast %46 : vector<1x8x512xf32> to vector<8x512xf32>
    %48 = vector.shape_cast %45 : vector<8x512xf32> to vector<1x8x512xf32>
    tpu.vector_store %arg6[%c0_27, %c0_28, %c0_29], %48 {strides = array<i32>} : memref<1x8x512xf32, #tpu.memory_space<vmem>>, vector<1x8x512xf32>,
    return
  }
  func.func @transform_0(%arg0: i32, %arg1: i32) -> (i32, i32) {
    %c1_i32 = arith.constant 1 : i32
    %0 = arith.muli %arg0, %c1_i32 : i32
    %1 = arith.addi %0, %arg1 : i32
    %c0_i32 = arith.constant 0 : i32
    %c0_i32_0 = arith.constant 0 : i32
    return %1, %c0_i32 : i32, i32
  }
  func.func @transform_1(%arg0: i32, %arg1: i32) -> (i32, i32) {
    %c1_i32 = arith.constant 1 : i32
    %0 = arith.muli %arg0, %c1_i32 : i32
    %1 = arith.addi %0, %arg1 : i32
    %c0_i32 = arith.constant 0 : i32
    %c0_i32_0 = arith.constant 0 : i32
    return %1, %c0_i32 : i32, i32
  }
  func.func @transform_2(%arg0: i32, %arg1: i32) -> (i32, i32, i32) {
    %c0_i32 = arith.constant 0 : i32
    %c0_i32_0 = arith.constant 0 : i32
    %c0_i32_1 = arith.constant 0 : i32
    return %arg0, %c0_i32, %c0_i32_0 : i32, i32, i32
  }
  func.func @transform_3(%arg0: i32, %arg1: i32) -> (i32, i32, i32) {
    %c0_i32 = arith.constant 0 : i32
    %c0_i32_0 = arith.constant 0 : i32
    %c0_i32_1 = arith.constant 0 : i32
    return %arg0, %c0_i32, %c0_i32_0 : i32, i32, i32
  }
  func.func @transform_4(%arg0: i32, %arg1: i32) -> (i32, i32, i32) {
    %c0_i32 = arith.constant 0 : i32
    %c0_i32_0 = arith.constant 0 : i32
    %c0_i32_1 = arith.constant 0 : i32
    return %arg0, %c0_i32, %c0_i32_0 : i32, i32, i32
  }
}

</mosaic_0001>

<llo_original>
// kernel: tpu_custom_call.1
$region0: #{tpu_custom_call.1}
  #allocation0 [shape = 'u32[]', space=smem, size = 0x4, offset = 0x4, fixed_abs, tag = 'smem constant byte address 0x4 - core index']
  #allocation1 [shape = 'u32[144,128]{1,0:T(1,128)}', space=vmem, size = 0x12000, scoped, tag = 'internal scratch']
  %s0 = inlined_call_operand.hbm [shape: f32[8,512], index: 0, kind: input, shape index: {}]
  %s1 = inlined_call_operand.hbm [shape: f32[8,512], index: 1, kind: input, shape index: {}]
  %s2 = inlined_call_operand.hbm [shape: f32[1,8,512], index: 2, kind: output, shape index: {0}]
  %s3 = inlined_call_operand.hbm [shape: f32[1,8,512], index: 3, kind: output, shape index: {1}]
  %s4 = inlined_call_operand.hbm [shape: f32[1,8,512], index: 4, kind: output, shape index: {2}]
  %5 = xla_tuple %s2, %s3, %s4
  %s6 = sld [smem:[#allocation0]]
  $region46: #{tpu_custom_call.1} parent=0
    _
  %s8 = ssub.s32 1, %s6
  %s9 = scalar_select 0, %s8, %s6
  $region1: #{tpu_custom_call.1} parent=0
    #allocation2 [shape = 'u8[16384]{0}', space=vmem, size = 0x4000, scoped, tag = 'input window, operand 0, single buffered']
    #allocation3 [shape = 's32[1]{0}', space=sflag, size = 0x4, scoped, tag = 'scoped memory for tpu_custom_call.1']
    #allocation4 [shape = 's32[1]{0}', space=sflag, size = 0x4, scoped, tag = 'scoped memory for tpu_custom_call.1']
    #allocation5 [shape = 'u8[16384]{0}', space=vmem, size = 0x4000, scoped, tag = 'input window, operand 1, single buffered']
    #allocation6 [shape = 's32[1]{0}', space=sflag, size = 0x4, scoped, tag = 'scoped memory for tpu_custom_call.1']
    #allocation7 [shape = 'u8[16384]{0}', space=vmem, size = 0x4000, scoped, tag = 'output window, operand 0, single buffered']
    #allocation8 [shape = 'u8[16384]{0}', space=vmem, size = 0x4000, scoped, tag = 'output window, operand 1, single buffered']
    #allocation9 [shape = 's32[1]{0}', space=sflag, size = 0x4, scoped, tag = 'scoped memory for tpu_custom_call.1']
    #allocation10 [shape = 'u8[16384]{0}', space=vmem, size = 0x4000, scoped, tag = 'output window, operand 2, single buffered']
    %10 = vsyncpa [#allocation3], 0
    %11 = vsyncpa [#allocation6], 0
    %12 = vsyncpa [#allocation4], 0
    %13 = vsyncpa [#allocation9], 0
    // Predicated region
    $region2: #{tpu_custom_call.1} parent=1 // pred_check
      _
    $region3: #{tpu_custom_call.1} parent=1 // pred_check_branch
      %15 = sbr.rel (0) target = $region5
    $region4: #{tpu_custom_call.1} parent=1 // pred_region
      %s16 = sadd.s32 0, 0
      %s18 = ssub.s32 512, 512
      %19 = vsyncadd [#allocation3], %s18
      %s20 = smul.addr %s16, 4
      %s21 = smul.addr %s20, 128
      %s22 = scalar_lea.hbm %s0, %s21
      %s24 = sshll.u32 [#allocation2], 4
      %s25 = int_to_ptr.vmem [resolvable:$true] %s24
      %27 = dma.hbm_to_vmem [thread:$0]  %s22, 512, %s25, [#allocation3]
    $region5: #{tpu_custom_call.1} parent=1 // pred_fallthru
      _
    // Predicated region
    $region6: #{tpu_custom_call.1} parent=1 // pred_check
      _
    $region7: #{tpu_custom_call.1} parent=1 // pred_check_branch
      %29 = sbr.rel (0) target = $region9
    $region8: #{tpu_custom_call.1} parent=1 // pred_region
      %s30 = sadd.s32 0, 0
      %s32 = ssub.s32 512, 512
      %33 = vsyncadd [#allocation6], %s32
      %s34 = smul.addr %s30, 4
      %s35 = smul.addr %s34, 128
      %s36 = scalar_lea.hbm %s1, %s35
      %s38 = sshll.u32 [#allocation5], 4
      %s39 = int_to_ptr.vmem [resolvable:$true] %s38
      %41 = dma.hbm_to_vmem [thread:$0]  %s36, 512, %s39, [#allocation6]
    $region9: #{tpu_custom_call.1} parent=1 // pred_fallthru
      _
    // Predicated region
    $region10: #{tpu_custom_call.1} parent=1 // pred_check
      _
    $region11: #{tpu_custom_call.1} parent=1 // pred_check_branch
      %43 = sbr.rel (0) target = $region13
    $region12: #{tpu_custom_call.1} parent=1 // pred_region
      %44 = dma.done [#allocation3], 512
    $region13: #{tpu_custom_call.1} parent=1 // pred_fallthru
      _
    // Predicated region
    $region14: #{tpu_custom_call.1} parent=1 // pred_check
      _
    $region15: #{tpu_custom_call.1} parent=1 // pred_check_branch
      %46 = sbr.rel (0) target = $region17
    $region16: #{tpu_custom_call.1} parent=1 // pred_region
      %47 = dma.done [#allocation6], 512
    $region17: #{tpu_custom_call.1} parent=1 // pred_fallthru
      _
    %s48 = sadd.s32 0, 0
    %s49 = sadd.s32 0, 0
    %p50 = scmp.eq.s32.totalorder 0, 0
    // Predicated region
    $region18: #{tpu_custom_call.1} parent=1 // pred_check
      %p51 = pneg %p50
    $region19: #{tpu_custom_call.1} parent=1 // pred_check_branch
      %53 = sbr.rel (%p51) target = $region21
    $region20: #{tpu_custom_call.1} parent=1 // pred_region
      %54 = vst [vmem:[#allocation7] sm:$0xff] 0.0
      %55 = vst [vmem:[#allocation7 + $0x8] sm:$0xff] 0.0
      %56 = vst [vmem:[#allocation7 + $0x10] sm:$0xff] 0.0
      %57 = vst [vmem:[#allocation7 + $0x18] sm:$0xff] 0.0
      %58 = vst [vmem:[#allocation8] sm:$0xff] 0.0
      %59 = vst [vmem:[#allocation8 + $0x8] sm:$0xff] 0.0
      %60 = vst [vmem:[#allocation8 + $0x10] sm:$0xff] 0.0
      %61 = vst [vmem:[#allocation8 + $0x18] sm:$0xff] 0.0
      %62 = vst [vmem:[#allocation10] sm:$0xff] 0.0
      %63 = vst [vmem:[#allocation10 + $0x8] sm:$0xff] 0.0
      %64 = vst [vmem:[#allocation10 + $0x10] sm:$0xff] 0.0
      %65 = vst [vmem:[#allocation10 + $0x18] sm:$0xff] 0.0
    $region21: #{tpu_custom_call.1} parent=1 // pred_fallthru
      _
    %v66 = vld [vmem:[#allocation2] sm:$0xff]
    %v67 = vld [vmem:[#allocation2 + $0x8] sm:$0xff]
    %v68 = vld [vmem:[#allocation2 + $0x10] sm:$0xff]
    %v69 = vld [vmem:[#allocation2 + $0x18] sm:$0xff]
    %v70 = vld [vmem:[#allocation5] sm:$0xff]
    %v71 = vld [vmem:[#allocation5 + $0x8] sm:$0xff]
    %v72 = vld [vmem:[#allocation5 + $0x10] sm:$0xff]
    %v73 = vld [vmem:[#allocation5 + $0x18] sm:$0xff]
    %v74 = vmax.f32 %v66, 1e-06
    %v75 = vmax.f32 %v67, 1e-06
    %v76 = vmax.f32 %v68, 1e-06
    %v77 = vmax.f32 %v69, 1e-06
    %v78 = vmin.f32 %v74, 0.999999
    %v79 = vmin.f32 %v75, 0.999999
    %v80 = vmin.f32 %v76, 0.999999
    %v81 = vmin.f32 %v77, 0.999999
    %v82 = vmul.f32 %v78, %v70
    %v83 = vmul.f32 %v79, %v71
    %v84 = vmul.f32 %v80, %v72
    %v85 = vmul.f32 %v81, %v73
    %v86 = vsub.f32 %v78, %v82
    %v87 = vsub.f32 %v79, %v83
    %v88 = vsub.f32 %v80, %v84
    %v89 = vsub.f32 %v81, %v85
    %v90 = vsub.f32 0.0, %v78
    %v91 = vsub.f32 0.0, %v79
    %v92 = vsub.f32 0.0, %v80
    %v93 = vsub.f32 0.0, %v81
    %v94 = vmul.f32 %v90, 1.442695
    %v95 = vpow.pop %v94
    %v96 = vmul.f32 %v91, 1.442695
    %v97 = vpow.pop %v96
    %v98 = vmul.f32 %v92, 1.442695
    %v99 = vpow.pop %v98
    %v100 = vmul.f32 %v93, 1.442695
    %v101 = vpow.pop %v100
    %v102 = vadd.f32 %v95, 1.0
    %v103 = vlog2.pop %v102
    %v104 = vmul.f32 %v103, 0.6931472
    %v105 = vmul.f32 -0.5, %v95
    %v106 = vadd.f32 %v105, 1.0
    %v107 = vmul.f32 %v106, %v95
    %v108 = vand.u32 2147483647, %v95
    %vm109 = vcmp.lt.f32.partialorder %v108, 0.0004427343
    %v110 = vsel %vm109, %v107, %v104
    %v111 = vadd.f32 %v97, 1.0
    %v112 = vlog2.pop %v111
    %v113 = vmul.f32 %v112, 0.6931472
    %v114 = vmul.f32 -0.5, %v97
    %v115 = vadd.f32 %v114, 1.0
    %v116 = vmul.f32 %v115, %v97
    %v117 = vand.u32 2147483647, %v97
    %vm118 = vcmp.lt.f32.partialorder %v117, 0.0004427343
    %v119 = vsel %vm118, %v116, %v113
    %v120 = vadd.f32 %v99, 1.0
    %v121 = vlog2.pop %v120
    %v122 = vmul.f32 %v121, 0.6931472
    %v123 = vmul.f32 -0.5, %v99
    %v124 = vadd.f32 %v123, 1.0
    %v125 = vmul.f32 %v124, %v99
    %v126 = vand.u32 2147483647, %v99
    %vm127 = vcmp.lt.f32.partialorder %v126, 0.0004427343
    %v128 = vsel %vm127, %v125, %v122
    %v129 = vadd.f32 %v101, 1.0
    %v130 = vlog2.pop %v129
    %v131 = vmul.f32 %v130, 0.6931472
    %v132 = vmul.f32 -0.5, %v101
    %v133 = vadd.f32 %v132, 1.0
    %v134 = vmul.f32 %v133, %v101
    %v135 = vand.u32 2147483647, %v101
    %vm136 = vcmp.lt.f32.partialorder %v135, 0.0004427343
    %v137 = vsel %vm136, %v134, %v131
    %v138 = vadd.f32 %v86, %v110
    %v139 = vadd.f32 %v87, %v119
    %v140 = vadd.f32 %v88, %v128
    %v141 = vadd.f32 %v89, %v137
    %v142 = vsub.f32 0.0, %v138
    %v143 = vsub.f32 0.0, %v139
    %v144 = vsub.f32 0.0, %v140
    %v145 = vsub.f32 0.0, %v141
    %v146 = vmul.f32 %v142, 1.442695
    %v147 = vpow.pop %v146
    %v148 = vmul.f32 %v143, 1.442695
    %v149 = vpow.pop %v148
    %v150 = vmul.f32 %v144, 1.442695
    %v151 = vpow.pop %v150
    %v152 = vmul.f32 %v145, 1.442695
    %v153 = vpow.pop %v152
    %v154 = vsub.f32 1.0, %v147
    %v155 = vsub.f32 1.0, %v149
    %v156 = vsub.f32 1.0, %v151
    %v157 = vsub.f32 1.0, %v153
    %v158 = vmul.f32 %v154, %v138
    %v159 = vmul.f32 %v155, %v139
    %v160 = vmul.f32 %v156, %v140
    %v161 = vmul.f32 %v157, %v141
    %v162 = vmul.f32 %v158, 0.25
    %v163 = vmul.f32 %v159, 0.25
    %v164 = vmul.f32 %v160, 0.25
    %v165 = vmul.f32 %v161, 0.25
    %v166 = vld [vmem:[#allocation7] sm:$0xff]
    %v167 = vld [vmem:[#allocation7 + $0x8] sm:$0xff]
    %v168 = vld [vmem:[#allocation7 + $0x10] sm:$0xff]
    %v169 = vld [vmem:[#allocation7 + $0x18] sm:$0xff]
    %v170 = vadd.f32 %v162, 0.0
    %v171 = vadd.f32 %v163, 0.0
    %v172 = vadd.f32 %v164, 0.0
    %v173 = vadd.f32 %v165, 0.0
    %v174 = vadd.f32 %v166, %v170
    %v175 = vadd.f32 %v167, %v171
    %v176 = vadd.f32 %v168, %v172
    %v177 = vadd.f32 %v169, %v173
    %178 = vst [vmem:[#allocation7] sm:$0xff] %v174
    %179 = vst [vmem:[#allocation7 + $0x8] sm:$0xff] %v175
    %180 = vst [vmem:[#allocation7 + $0x10] sm:$0xff] %v176
    %181 = vst [vmem:[#allocation7 + $0x18] sm:$0xff] %v177
    %v182 = vld [vmem:[#allocation8] sm:$0xff]
    %v183 = vld [vmem:[#allocation8 + $0x8] sm:$0xff]
    %v184 = vld [vmem:[#allocation8 + $0x10] sm:$0xff]
    %v185 = vld [vmem:[#allocation8 + $0x18] sm:$0xff]
    %v186 = vadd.f32 %v78, %v70
    %v187 = vadd.f32 %v79, %v71
    %v188 = vadd.f32 %v80, %v72
    %v189 = vadd.f32 %v81, %v73
    %v190 = vadd.f32 %v186, 0.0
    %v191 = vadd.f32 %v187, 0.0
    %v192 = vadd.f32 %v188, 0.0
    %v193 = vadd.f32 %v189, 0.0
    %v194 = vadd.f32 %v182, %v190
    %v195 = vadd.f32 %v183, %v191
    %v196 = vadd.f32 %v184, %v192
    %v197 = vadd.f32 %v185, %v193
    %198 = vst [vmem:[#allocation8] sm:$0xff] %v194
    %199 = vst [vmem:[#allocation8 + $0x8] sm:$0xff] %v195
    %200 = vst [vmem:[#allocation8 + $0x10] sm:$0xff] %v196
    %201 = vst [vmem:[#allocation8 + $0x18] sm:$0xff] %v197
    %v202 = vld [vmem:[#allocation10] sm:$0xff]
    %v203 = vld [vmem:[#allocation10 + $0x8] sm:$0xff]
    %v204 = vld [vmem:[#allocation10 + $0x10] sm:$0xff]
    %v205 = vld [vmem:[#allocation10 + $0x18] sm:$0xff]
    %v206 = vadd.f32 %v82, 0.0
    %v207 = vadd.f32 %v83, 0.0
    %v208 = vadd.f32 %v84, 0.0
    %v209 = vadd.f32 %v85, 0.0
    %v210 = vadd.f32 %v202, %v206
    %v211 = vadd.f32 %v203, %v207
    %v212 = vadd.f32 %v204, %v208
    %v213 = vadd.f32 %v205, %v209
    %214 = vst [vmem:[#allocation10] sm:$0xff] %v210
    %215 = vst [vmem:[#allocation10 + $0x8] sm:$0xff] %v211
    %216 = vst [vmem:[#allocation10 + $0x10] sm:$0xff] %v212
    %217 = vst [vmem:[#allocation10 + $0x18] sm:$0xff] %v213
    // Predicated region
    $region22: #{tpu_custom_call.1} parent=1 // pred_check
      _
    $region23: #{tpu_custom_call.1} parent=1 // pred_check_branch
      %219 = sbr.rel (0) target = $region25
    $region24: #{tpu_custom_call.1} parent=1 // pred_region
      %s221 = ssub.s32 512, 512
      %222 = vsyncadd [#allocation4], %s221
      %s224 = sshll.u32 [#allocation7], 4
      %s225 = int_to_ptr.vmem [resolvable:$true] %s224
      %227 = dma.vmem_to_hbm [thread:$0]  %s225, 512, %s2, [#allocation4]
    $region25: #{tpu_custom_call.1} parent=1 // pred_fallthru
      _
    // Predicated region
    $region26: #{tpu_custom_call.1} parent=1 // pred_check
      _
    $region27: #{tpu_custom_call.1} parent=1 // pred_check_branch
      %229 = sbr.rel (0) target = $region29
    $region28: #{tpu_custom_call.1} parent=1 // pred_region
      %s231 = ssub.s32 512, 512
      %232 = vsyncadd [#allocation9], %s231
      %s234 = sshll.u32 [#allocation8], 4
      %s235 = int_to_ptr.vmem [resolvable:$true] %s234
      %237 = dma.vmem_to_hbm [thread:$0]  %s235, 512, %s3, [#allocation9]
    $region29: #{tpu_custom_call.1} parent=1 // pred_fallthru
      _
    // Predicated region
    $region30: #{tpu_custom_call.1} parent=1 // pred_check
      _
    $region31: #{tpu_custom_call.1} parent=1 // pred_check_branch
      %239 = sbr.rel (0) target = $region33
    $region32: #{tpu_custom_call.1} parent=1 // pred_region
      %s241 = ssub.s32 512, 512
      %242 = vsyncadd [#allocation9], %s241
      %s244 = sshll.u32 [#allocation10], 4
      %s245 = int_to_ptr.vmem [resolvable:$true] %s244
      %247 = dma.vmem_to_hbm [thread:$0]  %s245, 512, %s4, [#allocation9]
    $region33: #{tpu_custom_call.1} parent=1 // pred_fallthru
      _
    // Predicated region
    $region34: #{tpu_custom_call.1} parent=1 // pred_check
      _
    $region35: #{tpu_custom_call.1} parent=1 // pred_check_branch
      %249 = sbr.rel (0) target = $region37
    $region36: #{tpu_custom_call.1} parent=1 // pred_region
      %250 = dma.done [#allocation4], 512
    $region37: #{tpu_custom_call.1} parent=1 // pred_fallthru
      _
    // Predicated region
    $region38: #{tpu_custom_call.1} parent=1 // pred_check
      _
    $region39: #{tpu_custom_call.1} parent=1 // pred_check_branch
      %252 = sbr.rel (0) target = $region41
    $region40: #{tpu_custom_call.1} parent=1 // pred_region
      %253 = dma.done [#allocation9], 512
    $region41: #{tpu_custom_call.1} parent=1 // pred_fallthru
      _
    // Predicated region
    $region42: #{tpu_custom_call.1} parent=1 // pred_check
      _
    $region43: #{tpu_custom_call.1} parent=1 // pred_check_branch
      %255 = sbr.rel (0) target = $region45
    $region44: #{tpu_custom_call.1} parent=1 // pred_region
      %256 = dma.done [#allocation9], 512
    $region45: #{tpu_custom_call.1} parent=1 // pred_fallthru
      _
    %257 = vsyncpa [#allocation3], 1
    %258 = vsyncpa [#allocation6], 1
    %259 = vsyncpa [#allocation4], 1
    %260 = vsyncpa [#allocation9], 1

</llo_original>
